<compile_context>
chip_gen: v7x
topology: tpu7x:2x2x1
jax: 0.10.0
libtpu: 0.0.40
codegen_flags: <defaults>
</compile_context>

<pallas_src>
import functools

import jax
import jax.numpy as jnp
import numpy as np
from jax import lax
from jax.experimental import pallas as pl
from jax.experimental.pallas import tpu as pltpu


def _cdiv(a, b):
    return -(-a // b)


def _round_up(x, m):
    return _cdiv(x, m) * m


# ---------------------------------------------------------------------------
# Pallas kernel: fused logits + softmax + weighted-context + running max-pool
# ---------------------------------------------------------------------------
def _attn_pool_kernel(s_ref, text_ref, img_ref, out_ref, acc_ref,
                      *, L, TL, nL, apply_mask):
    """One (batch, L-split) pair, one L tile.

    s_ref:    (1, T, idf)    text^T @ W  (conv1x1 weight folded onto text)
    text_ref: (1, cdf, T)    text features
    img_ref:  (1, idf, TL)   image pixels: channels on sublanes, pixels on lanes
    out_ref:  (1, 1, cdf, 1) per-channel max for this (batch, split)
    acc_ref:  (cdf, TL) f32  running per-lane max scratch (VPU-only per tile)
    """
    l_idx = pl.program_id(2)

    x = img_ref[0]                                     # (idf, TL), native dtype
    s = s_ref[0]                                       # (T, idf)
    t = text_ref[0]                                    # (cdf, T)

    # logits^T = s @ x : (T, TL) -- TL (multiple of 256) stays lane-dense.
    # TODO(synk): when idf/T are tiny (<~16) a VPU broadcast-FMA loop would
    #             beat the (K-padded) MXU here; MXU path kept for generality.
    logits = jnp.dot(s.astype(x.dtype), x,
                     preferred_element_type=jnp.float32)          # (T, TL)

    # Softmax over the text axis (sublane axis 0); matches nn.Softmax applied
    # on the (B*L, T) view of attn.
    m = jnp.max(logits, axis=0, keepdims=True)                    # (1, TL)
    e = jnp.exp(logits - m)                                       # (T, TL)
    denom = jnp.sum(e, axis=0, keepdims=True)                     # (1, TL)
    attn = e * pl.reciprocal(denom, approx=True)                  # (T, TL)
    # attn.data.masked_fill_(attn != attn, 0)
    attn = jnp.where(attn != attn, jnp.float32(0.0), attn)

    # weightedContext for this tile: (cdf, TL) = text @ attn^T
    wc = jnp.dot(t, attn.astype(t.dtype),
                 preferred_element_type=jnp.float32)              # (cdf, TL)

    if apply_mask:
        # Padded pixels (indices L .. L_pad) must not win the spatial max.
        tile = pl.program_id(1) * nL + l_idx
        lane = lax.broadcasted_iota(jnp.int32, wc.shape, 1)
        valid = (tile * TL + lane) < L
        wc = jnp.where(valid, wc, -jnp.inf)

    @pl.when(l_idx == 0)
    def _():
        acc_ref[...] = wc

    @pl.when(l_idx != 0)
    def _():
        acc_ref[...] = jnp.maximum(acc_ref[...], wc)

    # Single cross-lane (XLU) reduce + tiny store, once per (batch, split).
    @pl.when(l_idx == nL - 1)
    def _():
        out_ref[...] = jnp.max(acc_ref[...], axis=-1, keepdims=True)[None, None]


# ---------------------------------------------------------------------------
# Wrapper
# ---------------------------------------------------------------------------
def image_text_attention_forward(image, text, conv_w, *, max_l_tile=1024):
    """image: (B, idf, ih, iw); text: (B, cdf, T); conv_w: (cdf, idf, 1, 1).

    Module-default forward: softmax image->text attention, weighted context,
    AdaptiveMaxPool2d(1) broadcast back to (B, cdf, ih, iw).
    """
    # TODO(synk): mask / image_mask masking, the multi_peak sigmoid branch,
    #             'avg' / no-pooling and inverse_attention are not implemented
    #             (module defaults only).
    B, idf, ih, iw = image.shape
    cdf = conv_w.shape[0]
    T = text.shape[2]
    L = ih * iw

    # Fold the bias-free 1x1 conv onto the tiny text side ONCE (hoisted out of
    # the per-L-tile path): s[b] = text[b]^T @ W  -> (B, T, idf). Tiny op.
    w2 = conv_w.reshape(cdf, idf)
    s_arr = jnp.einsum("bct,ci->bti", text.astype(jnp.float32),
                       w2.astype(jnp.float32))

    # Image streams in its native dtype (no f32 up-cast); pixels lane-dense.
    img_flat = image.reshape(B, idf, L)

    # Tiling: 256-aligned lane tiles (v6e/v7x MXU), capped for VMEM headroom.
    ALIGN = 256
    tl_cap = max(ALIGN, (max_l_tile // ALIGN) * ALIGN)
    TL = min(tl_cap, _round_up(L, ALIGN))
    total_tiles = _cdiv(L, TL)
    # Megacore occupancy when B == 1: split the L axis across 2 parallel halves.
    NS = 2 if (B == 1 and total_tiles >= 2) else 1
    nL = _cdiv(total_tiles, NS)
    L_pad = NS * nL * TL
    if L_pad != L:
        img_flat = jnp.pad(img_flat, ((0, 0), (0, 0), (0, L_pad - L)))

    kernel = functools.partial(_attn_pool_kernel, L=L, TL=TL, nL=nL,
                               apply_mask=(L_pad != L))

    partial_max = pl.pallas_call(
        kernel,
        out_shape=jax.ShapeDtypeStruct((B, NS, cdf, 1), jnp.float32),
        grid=(B, NS, nL),
        in_specs=[
            pl.BlockSpec((1, T, idf), lambda b, s, l: (b, 0, 0)),
            pl.BlockSpec((1, cdf, T), lambda b, s, l: (b, 0, 0)),
            # NOTE: bump to pipeline_mode=pl.Buffered(3) here if profiling
            # shows exposed DMA on the image stream (VMEM headroom permits).
            pl.BlockSpec((1, idf, TL), lambda b, s, l: (b, 0, s * nL + l)),
        ],
        out_specs=pl.BlockSpec((1, 1, cdf, 1), lambda b, s, l: (b, s, 0, 0)),
        scratch_shapes=[pltpu.VMEM((cdf, TL), jnp.float32)],
        compiler_params=pltpu.CompilerParams(
            dimension_semantics=("parallel", "parallel", "arbitrary"),
            vmem_limit_bytes=32 * 1024 * 1024),
    )(s_arr, text, img_flat)

    # Combine split halves (trivial), then AdaptiveMaxPool2d(1).repeat(ih, iw):
    # the only full-size HBM write, done once by XLA on the way out.
    pooled = jnp.max(partial_max, axis=1).reshape(B, cdf, 1, 1)
    return jnp.broadcast_to(pooled, (B, cdf, ih, iw))


# ---------------------------------------------------------------------------
# Pure-JAX reference (PyTorch operation order) for in-script sanity check
# ---------------------------------------------------------------------------
def _ref_forward(image, text, conv_w):
    B, idf, ih, iw = image.shape
    cdf = conv_w.shape[0]
    L = ih * iw
    w = conv_w.reshape(cdf, idf).astype(jnp.float32)
    image = image.astype(jnp.float32)
    text = text.astype(jnp.float32)
    proj = jnp.einsum("oi,bihw->bohw", w, image)            # conv1x1, no bias
    proj_flat = proj.reshape(B, cdf, L)
    attn = jnp.einsum("bcl,bct->blt", proj_flat, text)      # bmm(image^T, text)
    attn = jax.nn.softmax(attn, axis=-1)
    wc = jnp.einsum("bct,blt->bcl", text, attn)             # bmm(text, attn^T)
    wc = wc.reshape(B, cdf, ih, iw)
    pooled = jnp.max(wc, axis=(2, 3), keepdims=True)        # AdaptiveMaxPool2d(1)
    return jnp.broadcast_to(pooled, wc.shape)               # .repeat(1,1,ih,iw)


# ---------------------------------------------------------------------------
# main
# ---------------------------------------------------------------------------
if __name__ == "__main__":
    key = jax.random.PRNGKey(0)
    k1, k2, k3, k4, k5, k6 = jax.random.split(key, 6)

    # Case 1: module-typical small shapes (B=2, idf=4, 16x16, cdf=32, T=8).
    image = jax.random.normal(k1, (2, 4, 16, 16), jnp.float32)
    text = jax.random.normal(k2, (2, 32, 8), jnp.float32)
    conv_w = 0.1 * jax.random.normal(k3, (32, 4, 1, 1), jnp.float32)

    out = jax.block_until_ready(image_text_attention_forward(image, text, conv_w))
    assert out.shape == (2, 32, 16, 16), out.shape
    ref = jax.block_until_ready(_ref_forward(image, text, conv_w))
    np.testing.assert_allclose(np.asarray(out), np.asarray(ref),
                               rtol=2e-3, atol=2e-3)

    # Case 2: B=1 (exercises the megacore L-split), non-aligned L=784
    # (padding + lane mask) and multiple L tiles per split (running max).
    image2 = jax.random.normal(k4, (1, 8, 28, 28), jnp.float32)
    text2 = jax.random.normal(k5, (1, 16, 7), jnp.float32)
    conv_w2 = 0.1 * jax.random.normal(k6, (16, 8, 1, 1), jnp.float32)

    out2 = jax.block_until_ready(
        image_text_attention_forward(image2, text2, conv_w2, max_l_tile=256))
    assert out2.shape == (1, 16, 28, 28), out2.shape
    ref2 = jax.block_until_ready(_ref_forward(image2, text2, conv_w2))
    np.testing.assert_allclose(np.asarray(out2), np.asarray(ref2),
                               rtol=2e-3, atol=2e-3)

    print("KERNEL_OK")
</pallas_src>

<mosaic_0001>
module attributes {stable_mosaic.version = 11 : i64} {
  func.func @_attn_pool_kernel(%arg0: i32, %arg1: i32, %arg2: i32, %arg3: memref<1x8x4xf32, #tpu.memory_space<vmem>>, %arg4: memref<1x32x8xf32, #tpu.memory_space<vmem>>, %arg5: memref<1x4x256xf32, #tpu.memory_space<vmem>>, %arg6: memref<1x1x32x1xf32, #tpu.memory_space<vmem>>, %arg7: memref<32x256xf32, #tpu.memory_space<vmem>>) attributes {dimension_semantics = [#tpu.dimension_semantics<parallel>, #tpu.dimension_semantics<parallel>, #tpu.dimension_semantics<arbitrary>], iteration_bounds = array<i64: 2, 1, 1>, scalar_prefetch = 0 : i64, scratch_operands = 1 : i64, tpu.core_type = #tpu.core_type<tc>, window_params = [{transform_indices = @transform_0, window_bounds = array<i64: 1, 8, 4>}, {transform_indices = @transform_1, window_bounds = array<i64: 1, 32, 8>}, {transform_indices = @transform_2, window_bounds = array<i64: 1, 4, 256>}, {transform_indices = @transform_3, window_bounds = array<i64: 1, 1, 32, 1>}]} {
    %c0 = arith.constant 0 : index
    %c0_0 = arith.constant 0 : index
    %c0_1 = arith.constant 0 : index
    %0 = vector.load %arg5[%c0, %c0_0, %c0_1] : memref<1x4x256xf32, #tpu.memory_space<vmem>>, vector<1x4x256xf32>
    %1 = vector.shape_cast %0 : vector<1x4x256xf32> to vector<4x256xf32>
    %c0_2 = arith.constant 0 : index
    %c0_3 = arith.constant 0 : index
    %c0_4 = arith.constant 0 : index
    %2 = vector.load %arg3[%c0_2, %c0_3, %c0_4] : memref<1x8x4xf32, #tpu.memory_space<vmem>>, vector<1x8x4xf32>
    %3 = vector.shape_cast %2 : vector<1x8x4xf32> to vector<8x4xf32>
    %c0_5 = arith.constant 0 : index
    %c0_6 = arith.constant 0 : index
    %c0_7 = arith.constant 0 : index
    %4 = vector.load %arg4[%c0_5, %c0_6, %c0_7] : memref<1x32x8xf32, #tpu.memory_space<vmem>>, vector<1x32x8xf32>
    %5 = vector.shape_cast %4 : vector<1x32x8xf32> to vector<32x8xf32>
    %cst = arith.constant dense<0.000000e+00> : vector<8x256xf32>
    %6 = tpu.matmul %3, %1, %cst {dimension_numbers = #tpu.dot_dimension_numbers<[1], [0], [0], [1], [0, 0, 1, 1], [], []>} : vector<8x4xf32>, vector<4x256xf32>, vector<8x256xf32> -> vector<8x256xf32>
    %cst_8 = arith.constant dense<0xFF800000> : vector<256xf32>
    %7 = vector.multi_reduction <maximumf>, %6, %cst_8 [0] : vector<8x256xf32> to vector<256xf32>
    %8 = vector.shape_cast %7 : vector<256xf32> to vector<1x256xf32>
    %9 = vector.broadcast %8 : vector<1x256xf32> to vector<8x256xf32>
    %10 = arith.subf %6, %9 : vector<8x256xf32>
    %11 = math.exp %10 : vector<8x256xf32>
    %cst_9 = arith.constant dense<0.000000e+00> : vector<256xf32>
    %12 = vector.multi_reduction <add>, %11, %cst_9 [0] : vector<8x256xf32> to vector<256xf32>
    %13 = vector.shape_cast %12 : vector<256xf32> to vector<1x256xf32>
    %14 = tpu.reciprocal %13 {approx = true} : vector<1x256xf32> -> vector<1x256xf32>
    %15 = vector.broadcast %14 : vector<1x256xf32> to vector<8x256xf32>
    %16 = arith.mulf %11, %15 : vector<8x256xf32>
    %17 = arith.cmpf one, %16, %16 : vector<8x256xf32>
    %cst_10 = arith.constant 0.000000e+00 : f32
    %18 = vector.broadcast %cst_10 : f32 to vector<8x256xf32>
    %19 = arith.select %17, %18, %16 : vector<8x256xi1>, vector<8x256xf32>
    %cst_11 = arith.constant dense<0.000000e+00> : vector<32x256xf32>
    %20 = tpu.matmul %5, %19, %cst_11 {dimension_numbers = #tpu.dot_dimension_numbers<[1], [0], [0], [1], [0, 0, 1, 1], [], []>} : vector<32x8xf32>, vector<8x256xf32>, vector<32x256xf32> -> vector<32x256xf32>
    %c0_i32 = arith.constant 0 : i32
    %21 = arith.cmpi eq, %arg2, %c0_i32 : i32
    %22 = arith.extui %21 : i1 to i32
    %c0_i32_12 = arith.constant 0 : i32
    %23 = arith.cmpi ne, %22, %c0_i32_12 : i32
    scf.if %23 {
      %c0_17 = arith.constant 0 : index
      %c0_18 = arith.constant 0 : index
      %30 = vector.load %arg7[%c0_17, %c0_18] : memref<32x256xf32, #tpu.memory_space<vmem>>, vector<32x256xf32>
      tpu.vector_store %arg7[%c0_17, %c0_18], %20 {strides = array<i32>} : memref<32x256xf32, #tpu.memory_space<vmem>>, vector<32x256xf32>,
    } else {
    }
    %c0_i32_13 = arith.constant 0 : i32
    %24 = arith.cmpi ne, %arg2, %c0_i32_13 : i32
    %25 = arith.extui %24 : i1 to i32
    %c0_i32_14 = arith.constant 0 : i32
    %26 = arith.cmpi ne, %25, %c0_i32_14 : i32
    scf.if %26 {
      %c0_17 = arith.constant 0 : index
      %c0_18 = arith.constant 0 : index
      %30 = vector.load %arg7[%c0_17, %c0_18] : memref<32x256xf32, #tpu.memory_space<vmem>>, vector<32x256xf32>
      %31 = arith.maximumf %30, %20 : vector<32x256xf32>
      %c0_19 = arith.constant 0 : index
      %c0_20 = arith.constant 0 : index
      %32 = vector.load %arg7[%c0_19, %c0_20] : memref<32x256xf32, #tpu.memory_space<vmem>>, vector<32x256xf32>
      tpu.vector_store %arg7[%c0_19, %c0_20], %31 {strides = array<i32>} : memref<32x256xf32, #tpu.memory_space<vmem>>, vector<32x256xf32>,
    } else {
    }
    %c0_i32_15 = arith.constant 0 : i32
    %27 = arith.cmpi eq, %arg2, %c0_i32_15 : i32
    %28 = arith.extui %27 : i1 to i32
    %c0_i32_16 = arith.constant 0 : i32
    %29 = arith.cmpi ne, %28, %c0_i32_16 : i32
    scf.if %29 {
      %c0_17 = arith.constant 0 : index
      %c0_18 = arith.constant 0 : index
      %30 = vector.load %arg7[%c0_17, %c0_18] : memref<32x256xf32, #tpu.memory_space<vmem>>, vector<32x256xf32>
      %cst_19 = arith.constant dense<0xFF800000> : vector<32xf32>
      %31 = vector.multi_reduction <maximumf>, %30, %cst_19 [1] : vector<32x256xf32> to vector<32xf32>
      %32 = vector.shape_cast %31 : vector<32xf32> to vector<32x1xf32>
      %33 = vector.shape_cast %32 : vector<32x1xf32> to vector<1x1x32x1xf32>
      %c0_20 = arith.constant 0 : index
      %c0_21 = arith.constant 0 : index
      %c0_22 = arith.constant 0 : index
      %c0_23 = arith.constant 0 : index
      %34 = vector.load %arg6[%c0_20, %c0_21, %c0_22, %c0_23] : memref<1x1x32x1xf32, #tpu.memory_space<vmem>>, vector<1x1x32x1xf32>
      tpu.vector_store %arg6[%c0_20, %c0_21, %c0_22, %c0_23], %33 {strides = array<i32>} : memref<1x1x32x1xf32, #tpu.memory_space<vmem>>, vector<1x1x32x1xf32>,
    } else {
    }
    return
  }
  func.func @transform_0(%arg0: i32, %arg1: i32, %arg2: i32) -> (i32, i32, i32) {
    %c0_i32 = arith.constant 0 : i32
    %c0_i32_0 = arith.constant 0 : i32
    %c0_i32_1 = arith.constant 0 : i32
    return %arg0, %c0_i32, %c0_i32_0 : i32, i32, i32
  }
  func.func @transform_1(%arg0: i32, %arg1: i32, %arg2: i32) -> (i32, i32, i32) {
    %c0_i32 = arith.constant 0 : i32
    %c0_i32_0 = arith.constant 0 : i32
    %c0_i32_1 = arith.constant 0 : i32
    return %arg0, %c0_i32, %c0_i32_0 : i32, i32, i32
  }
  func.func @transform_2(%arg0: i32, %arg1: i32, %arg2: i32) -> (i32, i32, i32) {
    %c1_i32 = arith.constant 1 : i32
    %0 = arith.muli %arg1, %c1_i32 : i32
    %1 = arith.addi %0, %arg2 : i32
    %c0_i32 = arith.constant 0 : i32
    %c0_i32_0 = arith.constant 0 : i32
    return %arg0, %c0_i32, %1 : i32, i32, i32
  }
  func.func @transform_3(%arg0: i32, %arg1: i32, %arg2: i32) -> (i32, i32, i32, i32) {
    %c0_i32 = arith.constant 0 : i32
    %c0_i32_0 = arith.constant 0 : i32
    %c0_i32_1 = arith.constant 0 : i32
    return %arg0, %arg1, %c0_i32, %c0_i32_0 : i32, i32, i32, i32
  }
}

</mosaic_0001>

<llo_original>
// kernel: tpu_custom_call.1
$region0: #{tpu_custom_call.1}
  #allocation0 [shape = 'u32[]', space=smem, size = 0x4, offset = 0x4, fixed_abs, tag = 'smem constant byte address 0x4 - core index']
  #allocation1 [shape = 'u32[144,128]{1,0:T(1,128)}', space=vmem, size = 0x12000, scoped, tag = 'internal scratch']
  #allocation2 [shape = 'f32[32,256]{1,0:T(8,128)}', space=vmem, size = 0x8000, scoped, tag = 'scratch operand']
  %s0 = inlined_call_operand.vmem [shape: f32[2,8,4], index: 0, kind: input, shape index: {}]
  %s1 = inlined_call_operand.vmem [shape: f32[2,32,8], index: 1, kind: input, shape index: {}]
  %s2 = inlined_call_operand.vmem [shape: f32[2,4,256], index: 2, kind: input, shape index: {}]
  %s3 = inlined_call_operand.vmem [shape: f32[2,1,32,1], index: 3, kind: output, shape index: {}]
  %s4 = sld [smem:[#allocation0]]
  $region57: #{tpu_custom_call.1} parent=0
    _
  %s6 = ssub.s32 1, %s4
  %s7 = scalar_select 0, %s6, %s4
  loop: start=0, step=1, limit=4
  $region2: #{tpu_custom_call.1} parent=0 // loop_pre_header
    _
  $region3: #{tpu_custom_call.1} parent=0 // loop_header
    %s9 = sphi 0, %s13
    %p10 = scmp.ge.s32.totalorder %s9, 4
    %s16 = sphi 0, %s35
    %s17 = sphi 0, %s31
    %s18 = sphi 0, %s27
    %s19 = sphi 0, %s16
    %s20 = sphi 0, %s17
    %s21 = sphi 0, %s18
    %s22 = sphi 0, %s19
    %s23 = sphi 0, %s20
    %s24 = sphi 0, %s21
    %s38 = sphi 0, %s40
    %s41 = sphi 0, %s38
    %s42 = sphi 0, %s41
    %s58 = sphi 0, %s42
    %s64 = sphi 0, %s66
    %s67 = sphi 0, %s64
    %s68 = sphi 0, %s67
    %s84 = sphi 0, %s68
    %s94 = sphi 0, %s96
    %s97 = sphi 0, %s94
    %s98 = sphi 0, %s97
    %s114 = sphi 0, %s98
    %s122 = sphi 0, %s124
    %s125 = sphi 0, %s122
    %s126 = sphi 0, %s125
    %s142 = sphi 0, %s126
  $region4: #{tpu_custom_call.1} parent=0 // loop_header_branch
    %12 = sbr.rel (%p10) target = $region8
  $region5: #{tpu_custom_call.1} parent=0 // loop_body
    %s14 = ssub.s32 %s9, 1
    %s15 = ssub.s32 %s9, 2
    %s25 = sadd.s32 1, %s18
    %p26 = scmp.ge.s32.totalorder %s25, 1
    %s27 = scalar_select %p26, 0, %s25
    %s28 = sadd.s32 1, %s17
    %s29 = scalar_select %p26, %s28, %s17
    %p30 = scmp.ge.s32.totalorder %s29, 1
    %s31 = scalar_select %p30, 0, %s29
    %s32 = sadd.s32 1, %s16
    %s33 = scalar_select %p30, %s32, %s16
    %p34 = scmp.ge.s32.totalorder %s33, 2
    %s35 = scalar_select %p34, 0, %s33
    %s36 = ssub.s32 %s16, %s35
    %p37 = scmp.eq.s32.totalorder %s36, 0
    %s39 = sadd.s32 %s38, 1
    %s40 = scalar_select %p37, %s38, %s39
    %p43 = pneg %p37
    %p44 = scmp.eq.s32.totalorder %s9, 1
    %p45 = por %p43, %p44
    %p46 = scmp.ne.s32.totalorder %s38, %s41
    %p47 = scmp.eq.s32.totalorder %s9, 0
    %p48 = por %p46, %p47
    %p49 = scmp.ne.s32.totalorder %s38, %s41
    %p50 = scmp.eq.s32.totalorder %s14, 1
    %p51 = por %p49, %p50
    %p52 = scmp.ne.s32.totalorder %s41, %s42
    %p53 = scmp.eq.s32.totalorder %s14, 0
    %p54 = por %p52, %p53
    %p55 = scmp.ne.s32.totalorder %s41, %s42
    %p56 = scmp.eq.s32.totalorder %s15, 1
    %p57 = por %p55, %p56
    %p59 = scmp.ne.s32.totalorder %s42, %s58
    %p60 = scmp.eq.s32.totalorder %s15, 0
    %p61 = por %p59, %p60
    %s62 = ssub.s32 %s16, %s35
    %p63 = scmp.eq.s32.totalorder %s62, 0
    %s65 = sadd.s32 %s64, 1
    %s66 = scalar_select %p63, %s64, %s65
    %p69 = pneg %p63
    %p70 = scmp.eq.s32.totalorder %s9, 1
    %p71 = por %p69, %p70
    %p72 = scmp.ne.s32.totalorder %s64, %s67
    %p73 = scmp.eq.s32.totalorder %s9, 0
    %p74 = por %p72, %p73
    %p75 = scmp.ne.s32.totalorder %s64, %s67
    %p76 = scmp.eq.s32.totalorder %s14, 1
    %p77 = por %p75, %p76
    %p78 = scmp.ne.s32.totalorder %s67, %s68
    %p79 = scmp.eq.s32.totalorder %s14, 0
    %p80 = por %p78, %p79
    %p81 = scmp.ne.s32.totalorder %s67, %s68
    %p82 = scmp.eq.s32.totalorder %s15, 1
    %p83 = por %p81, %p82
    %p85 = scmp.ne.s32.totalorder %s68, %s84
    %p86 = scmp.eq.s32.totalorder %s15, 0
    %p87 = por %p85, %p86
    %s88 = sadd.s32 %s17, %s18
    %s89 = sadd.s32 %s31, %s27
    %s90 = ssub.s32 %s16, %s35
    %s91 = ssub.s32 %s88, %s89
    %s92 = sor.u32 %s90, %s91
    %p93 = scmp.eq.s32.totalorder %s92, 0
    %s95 = sadd.s32 %s94, 1
    %s96 = scalar_select %p93, %s94, %s95
    %p99 = pneg %p93
    %p100 = scmp.eq.s32.totalorder %s9, 1
    %p101 = por %p99, %p100
    %p102 = scmp.ne.s32.totalorder %s94, %s97
    %p103 = scmp.eq.s32.totalorder %s9, 0
    %p104 = por %p102, %p103
    %p105 = scmp.ne.s32.totalorder %s94, %s97
    %p106 = scmp.eq.s32.totalorder %s14, 1
    %p107 = por %p105, %p106
    %p108 = scmp.ne.s32.totalorder %s97, %s98
    %p109 = scmp.eq.s32.totalorder %s14, 0
    %p110 = por %p108, %p109
    %p111 = scmp.ne.s32.totalorder %s97, %s98
    %p112 = scmp.eq.s32.totalorder %s15, 1
    %p113 = por %p111, %p112
    %p115 = scmp.ne.s32.totalorder %s98, %s114
    %p116 = scmp.eq.s32.totalorder %s15, 0
    %p117 = por %p115, %p116
    %s118 = ssub.s32 %s16, %s35
    %s119 = ssub.s32 %s17, %s31
    %s120 = sor.u32 %s118, %s119
    %p121 = scmp.eq.s32.totalorder %s120, 0
    %s123 = sadd.s32 %s122, 1
    %s124 = scalar_select %p121, %s122, %s123
    %p127 = pneg %p121
    %p128 = scmp.eq.s32.totalorder %s9, 1
    %p129 = por %p127, %p128
    %p130 = scmp.ne.s32.totalorder %s122, %s125
    %p131 = scmp.eq.s32.totalorder %s9, 0
    %p132 = por %p130, %p131
    %p133 = scmp.ne.s32.totalorder %s122, %s125
    %p134 = scmp.eq.s32.totalorder %s14, 1
    %p135 = por %p133, %p134
    %p136 = scmp.ne.s32.totalorder %s125, %s126
    %p137 = scmp.eq.s32.totalorder %s14, 0
    %p138 = por %p136, %p137
    %p139 = scmp.ne.s32.totalorder %s125, %s126
    %p140 = scmp.eq.s32.totalorder %s15, 1
    %p141 = por %p139, %p140
    %p143 = scmp.ne.s32.totalorder %s126, %s142
    %p144 = scmp.eq.s32.totalorder %s15, 0
    %p145 = por %p143, %p144
    %p146 = scmp.le.s32.totalorder 1, %s9
    %p147 = scmp.lt.s32.totalorder %s9, 3
    %p148 = pnand %p146, %p147
    %p149 = pneg %p148
    // Predicated region
    $region9: #{tpu_custom_call.1} parent=5 // pred_check
      _
    $region10: #{tpu_custom_call.1} parent=5 // pred_check_branch
      %151 = sbr.rel (%p148) target = $region12
    $region11: #{tpu_custom_call.1} parent=5 // pred_region
      %s152 = ssub.s32 %s9, 1
    $region12: #{tpu_custom_call.1} parent=5 // pred_fallthru
      _
    %p153 = scmp.lt.s32.totalorder %s9, 2
    // Predicated region
    $region13: #{tpu_custom_call.1} parent=5 // pred_check
      %p154 = pneg %p153
    $region14: #{tpu_custom_call.1} parent=5 // pred_check_branch
      %156 = sbr.rel (%p154) target = $region16
    $region15: #{tpu_custom_call.1} parent=5 // pred_region
      // Predicated region
      $region17: #{tpu_custom_call.1} parent=15 // pred_check
        %p157 = pneg %p48
      $region18: #{tpu_custom_call.1} parent=15 // pred_check_branch
        %159 = sbr.rel (%p157) target = $region20
      $region19: #{tpu_custom_call.1} parent=15 // pred_region
        %p160 = scmp.lt.s32.totalorder %s16, 1
        %s161 = scalar_select %p160, %s16, 1
        %s162 = smul.addr %s161, 8
        %s163 = scalar_lea.vmem %s0, %s162
      $region20: #{tpu_custom_call.1} parent=15 // pred_fallthru
        _
      // Predicated region
      $region21: #{tpu_custom_call.1} parent=15 // pred_check
        %p164 = pneg %p74
      $region22: #{tpu_custom_call.1} parent=15 // pred_check_branch
        %166 = sbr.rel (%p164) target = $region24
      $region23: #{tpu_custom_call.1} parent=15 // pred_region
        %p167 = scmp.lt.s32.totalorder %s16, 1
        %s168 = scalar_select %p167, %s16, 1
        %s169 = smul.addr %s168, 4
        %s170 = smul.addr %s169, 8
        %s171 = scalar_lea.vmem %s1, %s170
      $region24: #{tpu_custom_call.1} parent=15 // pred_fallthru
        _
      // Predicated region
      $region25: #{tpu_custom_call.1} parent=15 // pred_check
        %p172 = pneg %p104
      $region26: #{tpu_custom_call.1} parent=15 // pred_check_branch
        %174 = sbr.rel (%p172) target = $region28
      $region27: #{tpu_custom_call.1} parent=15 // pred_region
        %s175 = sadd.s32 %s17, %s18
        %s176 = smul.u32 2, %s175
        %p177 = scmp.lt.s32.totalorder %s16, 1
        %s178 = scalar_select %p177, %s16, 1
        %p179 = scmp.lt.s32.totalorder %s176, 1
        %s180 = scalar_select %p179, %s176, 1
        %s181 = smul.addr %s178, 2
        %s182 = sadd.s32 %s180, %s181
        %s183 = smul.addr %s182, 4
        %s184 = scalar_lea.vmem %s2, %s183
        %s185 = sadd.s32 %s17, %s18
        %s186 = smul.u32 2, %s185
      $region28: #{tpu_custom_call.1} parent=15 // pred_fallthru
        _
    $region16: #{tpu_custom_call.1} parent=5 // pred_fallthru
      _
    %p187 = scmp.le.s32.totalorder 1, %s9
    %p188 = scmp.lt.s32.totalorder %s9, 3
    %p189 = pnand %p187, %p188
    %p190 = pneg %p189
    // Predicated region
    $region29: #{tpu_custom_call.1} parent=5 // pred_check
      _
    $region30: #{tpu_custom_call.1} parent=5 // pred_check_branch
      %192 = sbr.rel (%p189) target = $region32
    $region31: #{tpu_custom_call.1} parent=5 // pred_region
      %s193 = ssub.s32 %s9, 1
      %p194 = scmp.lt.s32.totalorder %s19, 1
      %s195 = scalar_select %p194, %s19, 1
      %s196 = smul.addr %s195, 8
      %s197 = scalar_lea.vmem %s0, %s196
      %p198 = pneg %p54
      %p199 = pneg %p51
      %p200 = scmp.lt.s32.totalorder %s19, 1
      %s201 = scalar_select %p200, %s19, 1
      %s202 = smul.addr %s201, 4
      %s203 = smul.addr %s202, 8
      %s204 = scalar_lea.vmem %s1, %s203
      %p205 = pneg %p80
      %p206 = pneg %p77
      %s207 = sadd.s32 %s20, %s21
      %s208 = smul.u32 2, %s207
      %p209 = scmp.lt.s32.totalorder %s19, 1
      %s210 = scalar_select %p209, %s19, 1
      %p211 = scmp.lt.s32.totalorder %s208, 1
      %s212 = scalar_select %p211, %s208, 1
      %s213 = smul.addr %s210, 2
      %s214 = sadd.s32 %s212, %s213
      %s215 = smul.addr %s214, 4
      %s216 = scalar_lea.vmem %s2, %s215
      %p217 = pneg %p110
      %p218 = pneg %p107
      %p219 = pneg %p138
      %p220 = pneg %p135
      %p221 = scmp.lt.s32.totalorder %s19, 1
      %s222 = scalar_select %p221, %s19, 1
      %p223 = scmp.lt.s32.totalorder %s20, 0
      %s224 = scalar_select %p223, %s20, 0
      %s225 = smul.addr %s224, 4
      %s226 = smul.addr %s222, 4
      %s227 = sadd.s32 %s225, %s226
      %s228 = smul.addr %s227, 8
      %s229 = scalar_lea.vmem %s3, %s228
      %p230 = scmp.lt.s32.totalorder %s19, 1
      %s231 = scalar_select %p230, %s19, 1
      %s232 = smul.addr %s231, 8
      %s233 = scalar_lea.vmem %s0, %s232
      %p234 = scmp.lt.s32.totalorder %s19, 1
      %s235 = scalar_select %p234, %s19, 1
      %s236 = smul.addr %s235, 4
      %s237 = smul.addr %s236, 8
      %s238 = scalar_lea.vmem %s1, %s237
      %s239 = sadd.s32 %s20, %s21
      %s240 = smul.u32 2, %s239
      %p241 = scmp.lt.s32.totalorder %s19, 1
      %s242 = scalar_select %p241, %s19, 1
      %p243 = scmp.lt.s32.totalorder %s240, 1
      %s244 = scalar_select %p243, %s240, 1
      %s245 = smul.addr %s242, 2
      %s246 = sadd.s32 %s244, %s245
      %s247 = smul.addr %s246, 4
      %s248 = scalar_lea.vmem %s2, %s247
      %s249 = sadd.s32 %s20, %s21
      %s250 = smul.u32 2, %s249
      %p251 = scmp.lt.s32.totalorder %s19, 1
      %s252 = scalar_select %p251, %s19, 1
      %p253 = scmp.lt.s32.totalorder %s20, 0
      %s254 = scalar_select %p253, %s20, 0
      %s255 = smul.addr %s254, 4
      %s256 = smul.addr %s252, 4
      %s257 = sadd.s32 %s255, %s256
      %s258 = smul.addr %s257, 8
      %s259 = scalar_lea.vmem %s3, %s258
      %v260 = vld [vmem:[%s248] sm:$0xff]
      %v261 = vld [vmem:[%s233] sm:$0xff]
      %v262 = vld [vmem:[%s238] sm:$0xff]
      %v263 = vld [vmem:[%s238 + $0x8] sm:$0xff]
      %v264 = vld [vmem:[%s238 + $0x10] sm:$0xff]
      %v265 = vld [vmem:[%s238 + $0x18] sm:$0xff]
      %v267 = vcombine.high %v260, %v260
      %vm268 = vcmask 31744
      %v270 = vsel %vm268, %v261, 0
      %vm272 = vcmask 1043456
      %v273 = vsel %vm272, %v260, 0
      %v275 = vsel %vm272, %v267, 0
      %277 = vmatprep.subr.mxu0 %v275
      %278 = vmatpush1.msra.mxu0 %v273
      %279 = vmatprep.subr.mxu0 0.0
      %280 = vmatpush1.msra.mxu0 0.0
      %281 = vmatprep.subr.mxu0 0.0
      %282 = vmatpush1.msra.mxu0 0.0
      %283 = vmatprep.subr.mxu0 0.0
      %284 = vmatpush1.msra.mxu0 0.0
      %285 = vmatprep.subr.mxu0 0.0
      %286 = vmatpush1.msra.mxu0 0.0
      %287 = vmatprep.subr.mxu0 0.0
      %288 = vmatpush1.msra.mxu0 0.0
      %289 = vmatprep.subr.mxu0 0.0
      %290 = vmatpush1.msra.mxu0 0.0
      %291 = vmatprep.subr.mxu0 0.0
      %292 = vmatpush1.msra.mxu0 0.0
      %293 = vmatprep.subr.mxu0 0.0
      %294 = vmatpush1.msra.mxu0 0.0
      %295 = vmatprep.subr.mxu0 0.0
      %296 = vmatpush1.msra.mxu0 0.0
      %297 = vmatprep.subr.mxu0 0.0
      %298 = vmatpush1.msra.mxu0 0.0
      %299 = vmatprep.subr.mxu0 0.0
      %300 = vmatpush1.msra.mxu0 0.0
      %301 = vmatprep.subr.mxu0 0.0
      %302 = vmatpush1.msra.mxu0 0.0
      %303 = vmatprep.subr.mxu0 0.0
      %304 = vmatpush1.msra.mxu0 0.0
      %305 = vmatprep.subr.mxu0 0.0
      %306 = vmatpush1.msra.mxu0 0.0
      %307 = vmatprep.subr.mxu0 0.0
      %308 = vmatpush1.msra.mxu0 0.0
      %309 = vmatprep.subr.mxu0 0.0
      %310 = vmatpush1.msra.mxu0 0.0
      %311 = vmatprep.subr.mxu0 0.0
      %312 = vmatpush1.msra.mxu0 0.0
      %313 = vmatprep.subr.mxu0 0.0
      %314 = vmatpush1.msra.mxu0 0.0
      %315 = vmatprep.subr.mxu0 0.0
      %316 = vmatpush1.msra.mxu0 0.0
      %317 = vmatprep.subr.mxu0 0.0
      %318 = vmatpush1.msra.mxu0 0.0
      %319 = vmatprep.subr.mxu0 0.0
      %320 = vmatpush1.msra.mxu0 0.0
      %321 = vmatprep.subr.mxu0 0.0
      %322 = vmatpush1.msra.mxu0 0.0
      %323 = vmatprep.subr.mxu0 0.0
      %324 = vmatpush1.msra.mxu0 0.0
      %325 = vmatprep.subr.mxu0 0.0
      %326 = vmatpush1.msra.mxu0 0.0
      %327 = vmatprep.subr.mxu0 0.0
      %328 = vmatpush1.msra.mxu0 0.0
      %329 = vmatprep.subr.mxu0 0.0
      %330 = vmatpush1.msra.mxu0 0.0
      %331 = vmatprep.subr.mxu0 0.0
      %332 = vmatpush1.msra.mxu0 0.0
      %333 = vmatprep.subr.mxu0 0.0
      %334 = vmatpush1.msra.mxu0 0.0
      %335 = vmatprep.subr.mxu0 0.0
      %336 = vmatpush1.msra.mxu0 0.0
      %337 = vmatprep.subr.mxu0 0.0
      %338 = vmatpush1.msra.mxu0 0.0
      %339 = vmatprep.subr.mxu0 0.0
      %340 = vmatpush1.msra.mxu0 0.0
      %341 = vmatprep.mubr.f32.mxu0 0.0
      %342 = vmatmul.mubr.f32.gmra.mrb[0].mxu0 %v270
      %v343 = vpop.f32.mrb[0].mxu0
      %v344 = vadd.f32 0.0, %v343
      %v345 = vpop.f32.mrb[0].mxu0
      %v346 = vadd.f32 0.0, %v345
      %347 = vdwg.mxu0
      %v348 = vrot.slane %v344, 4
      %v349 = vmax.f32 %v344, %v348
      %v350 = vrot.slane %v349, 2
      %v351 = vmax.f32 %v349, %v350
      %v352 = vrot.slane %v351, 1
      %v353 = vmax.f32 %v351, %v352
      %v354 = vrot.slane %v346, 4
      %v355 = vmax.f32 %v346, %v354
      %v356 = vrot.slane %v355, 2
      %v357 = vmax.f32 %v355, %v356
      %v358 = vrot.slane %v357, 1
      %v359 = vmax.f32 %v357, %v358
      %v360 = vsub.f32 %v344, %v353
      %v361 = vsub.f32 %v346, %v359
      %v362 = vmul.f32 %v360, 1.442695
      %v363 = vpow.pop %v362
      %v364 = vmul.f32 %v361, 1.442695
      %v365 = vpow.pop %v364
      %v366 = vrot.slane %v363, 4
      %v367 = vadd.f32 %v363, %v366
      %v368 = vrot.slane %v367, 2
      %v369 = vadd.f32 %v367, %v368
      %v370 = vrot.slane %v369, 1
      %v371 = vadd.f32 %v369, %v370
      %v372 = vrot.slane %v365, 4
      %v373 = vadd.f32 %v365, %v372
      %v374 = vrot.slane %v373, 2
      %v375 = vadd.f32 %v373, %v374
      %v376 = vrot.slane %v375, 1
      %v377 = vadd.f32 %v375, %v376
      %v378 = vrcp.pop %v371
      %v379 = vrcp.pop %v377
      %v380 = vmul.f32 %v363, %v378
      %v381 = vmul.f32 %v365, %v379
      %vm382 = vcmp.ne.f32.partialorder %v380, %v380
      %vm383 = vcmp.ne.f32.partialorder %v381, %v381
      %v384 = vsel %vm382, 0.0, %v380
      %v385 = vsel %vm383, 0.0, %v381
      %vm386 = vcmask 64512
      %v388 = vsel %vm386, %v262, 0
      %v391 = vsel %vm386, %v263, 0
      %v394 = vsel %vm386, %v264, 0
      %v397 = vsel %vm386, %v265, 0
      %399 = vmatprep.subr.mxu0 %v385
      %400 = vmatpush1.msra.mxu0 %v384
      %401 = vmatprep.subr.mxu0 0.0
      %402 = vmatpush1.msra.mxu0 0.0
      %403 = vmatprep.subr.mxu0 0.0
      %404 = vmatpush1.msra.mxu0 0.0
      %405 = vmatprep.subr.mxu0 0.0
      %406 = vmatpush1.msra.mxu0 0.0
      %407 = vmatprep.subr.mxu0 0.0
      %408 = vmatpush1.msra.mxu0 0.0
      %409 = vmatprep.subr.mxu0 0.0
      %410 = vmatpush1.msra.mxu0 0.0
      %411 = vmatprep.subr.mxu0 0.0
      %412 = vmatpush1.msra.mxu0 0.0
      %413 = vmatprep.subr.mxu0 0.0
      %414 = vmatpush1.msra.mxu0 0.0
      %415 = vmatprep.subr.mxu0 0.0
      %416 = vmatpush1.msra.mxu0 0.0
      %417 = vmatprep.subr.mxu0 0.0
      %418 = vmatpush1.msra.mxu0 0.0
      %419 = vmatprep.subr.mxu0 0.0
      %420 = vmatpush1.msra.mxu0 0.0
      %421 = vmatprep.subr.mxu0 0.0
      %422 = vmatpush1.msra.mxu0 0.0
      %423 = vmatprep.subr.mxu0 0.0
      %424 = vmatpush1.msra.mxu0 0.0
      %425 = vmatprep.subr.mxu0 0.0
      %426 = vmatpush1.msra.mxu0 0.0
      %427 = vmatprep.subr.mxu0 0.0
      %428 = vmatpush1.msra.mxu0 0.0
      %429 = vmatprep.subr.mxu0 0.0
      %430 = vmatpush1.msra.mxu0 0.0
      %431 = vmatprep.subr.mxu0 0.0
      %432 = vmatpush1.msra.mxu0 0.0
      %433 = vmatprep.subr.mxu0 0.0
      %434 = vmatpush1.msra.mxu0 0.0
      %435 = vmatprep.subr.mxu0 0.0
      %436 = vmatpush1.msra.mxu0 0.0
      %437 = vmatprep.subr.mxu0 0.0
      %438 = vmatpush1.msra.mxu0 0.0
      %439 = vmatprep.subr.mxu0 0.0
      %440 = vmatpush1.msra.mxu0 0.0
      %441 = vmatprep.subr.mxu0 0.0
      %442 = vmatpush1.msra.mxu0 0.0
      %443 = vmatprep.subr.mxu0 0.0
      %444 = vmatpush1.msra.mxu0 0.0
      %445 = vmatprep.subr.mxu0 0.0
      %446 = vmatpush1.msra.mxu0 0.0
      %447 = vmatprep.subr.mxu0 0.0
      %448 = vmatpush1.msra.mxu0 0.0
      %449 = vmatprep.subr.mxu0 0.0
      %450 = vmatpush1.msra.mxu0 0.0
      %451 = vmatprep.subr.mxu0 0.0
      %452 = vmatpush1.msra.mxu0 0.0
      %453 = vmatprep.subr.mxu0 0.0
      %454 = vmatpush1.msra.mxu0 0.0
      %455 = vmatprep.subr.mxu0 0.0
      %456 = vmatpush1.msra.mxu0 0.0
      %457 = vmatprep.subr.mxu0 0.0
      %458 = vmatpush1.msra.mxu0 0.0
      %459 = vmatprep.subr.mxu0 0.0
      %460 = vmatpush1.msra.mxu0 0.0
      %461 = vmatprep.subr.mxu0 0.0
      %462 = vmatpush1.msra.mxu0 0.0
      %463 = vmatprep.mubr.f32.mxu0 0.0
      %464 = vmatmul.mubr.f32.gmra.mrb[0].mxu0 %v388
      %v465 = vpop.f32.mrb[0].mxu0
      %v466 = vadd.f32 0.0, %v465
      %v467 = vpop.f32.mrb[0].mxu0
      %v468 = vadd.f32 0.0, %v467
      %469 = vmatprep.mubr.f32.mxu0 0.0
      %470 = vmatmul.mubr.f32.gmra.mrb[0].mxu0 %v391
      %v471 = vpop.f32.mrb[0].mxu0
      %v472 = vadd.f32 0.0, %v471
      %v473 = vpop.f32.mrb[0].mxu0
      %v474 = vadd.f32 0.0, %v473
      %475 = vmatprep.mubr.f32.mxu0 0.0
      %476 = vmatmul.mubr.f32.gmra.mrb[0].mxu0 %v394
      %v477 = vpop.f32.mrb[0].mxu0
      %v478 = vadd.f32 0.0, %v477
      %v479 = vpop.f32.mrb[0].mxu0
      %v480 = vadd.f32 0.0, %v479
      %481 = vmatprep.mubr.f32.mxu0 0.0
      %482 = vmatmul.mubr.f32.gmra.mrb[0].mxu0 %v397
      %v483 = vpop.f32.mrb[0].mxu0
      %v484 = vadd.f32 0.0, %v483
      %v485 = vpop.f32.mrb[0].mxu0
      %v486 = vadd.f32 0.0, %v485
      %487 = vdwg.mxu0
      %p488 = scmp.eq.s32.totalorder %s21, 0
      // Predicated region
      $region33: #{tpu_custom_call.1} parent=31 // pred_check
        %p489 = pneg %p488
      $region34: #{tpu_custom_call.1} parent=31 // pred_check_branch
        %491 = sbr.rel (%p489) target = $region36
      $region35: #{tpu_custom_call.1} parent=31 // pred_region
        %492 = vst [vmem:[#allocation2] sm:$0xff] %v466
        %493 = vst [vmem:[#allocation2 + $0x8] sm:$0xff] %v468
        %494 = vst [vmem:[#allocation2 + $0x10] sm:$0xff] %v472
        %495 = vst [vmem:[#allocation2 + $0x18] sm:$0xff] %v474
        %496 = vst [vmem:[#allocation2 + $0x20] sm:$0xff] %v478
        %497 = vst [vmem:[#allocation2 + $0x28] sm:$0xff] %v480
        %498 = vst [vmem:[#allocation2 + $0x30] sm:$0xff] %v484
        %499 = vst [vmem:[#allocation2 + $0x38] sm:$0xff] %v486
      $region36: #{tpu_custom_call.1} parent=31 // pred_fallthru
        _
      %p500 = scmp.ne.s32.totalorder %s21, 0
      // Predicated region
      $region37: #{tpu_custom_call.1} parent=31 // pred_check
        %p501 = pneg %p500
      $region38: #{tpu_custom_call.1} parent=31 // pred_check_branch
        %503 = sbr.rel (%p501) target = $region40
      $region39: #{tpu_custom_call.1} parent=31 // pred_region
        %v504 = vld [vmem:[#allocation2] sm:$0xff]
        %v505 = vld [vmem:[#allocation2 + $0x8] sm:$0xff]
        %v506 = vld [vmem:[#allocation2 + $0x10] sm:$0xff]
        %v507 = vld [vmem:[#allocation2 + $0x18] sm:$0xff]
        %v508 = vld [vmem:[#allocation2 + $0x20] sm:$0xff]
        %v509 = vld [vmem:[#allocation2 + $0x28] sm:$0xff]
        %v510 = vld [vmem:[#allocation2 + $0x30] sm:$0xff]
        %v511 = vld [vmem:[#allocation2 + $0x38] sm:$0xff]
        %v512 = vmax.f32 %v504, %v466
        %v513 = vmax.f32 %v505, %v468
        %v514 = vmax.f32 %v506, %v472
        %v515 = vmax.f32 %v507, %v474
        %v516 = vmax.f32 %v508, %v478
        %v517 = vmax.f32 %v509, %v480
        %v518 = vmax.f32 %v510, %v484
        %v519 = vmax.f32 %v511, %v486
        %520 = vst [vmem:[#allocation2] sm:$0xff] %v512
        %521 = vst [vmem:[#allocation2 + $0x8] sm:$0xff] %v513
        %522 = vst [vmem:[#allocation2 + $0x10] sm:$0xff] %v514
        %523 = vst [vmem:[#allocation2 + $0x18] sm:$0xff] %v515
        %524 = vst [vmem:[#allocation2 + $0x20] sm:$0xff] %v516
        %525 = vst [vmem:[#allocation2 + $0x28] sm:$0xff] %v517
        %526 = vst [vmem:[#allocation2 + $0x30] sm:$0xff] %v518
        %527 = vst [vmem:[#allocation2 + $0x38] sm:$0xff] %v519
      $region40: #{tpu_custom_call.1} parent=31 // pred_fallthru
        _
      // Predicated region
      $region41: #{tpu_custom_call.1} parent=31 // pred_check
        %p528 = pneg %p488
      $region42: #{tpu_custom_call.1} parent=31 // pred_check_branch
        %530 = sbr.rel (%p528) target = $region44
      $region43: #{tpu_custom_call.1} parent=31 // pred_region
        %v531 = vld [vmem:[#allocation2] sm:$0xff]
        %v532 = vld [vmem:[#allocation2 + $0x8] sm:$0xff]
        %v533 = vld [vmem:[#allocation2 + $0x10] sm:$0xff]
        %v534 = vld [vmem:[#allocation2 + $0x18] sm:$0xff]
        %v535 = vld [vmem:[#allocation2 + $0x20] sm:$0xff]
        %v536 = vld [vmem:[#allocation2 + $0x28] sm:$0xff]
        %v537 = vld [vmem:[#allocation2 + $0x30] sm:$0xff]
        %v538 = vld [vmem:[#allocation2 + $0x38] sm:$0xff]
        %v539 = vmax.f32 %v531, %v532
        %540 = vmax.xlane.f32.xlu0 %v539
        %v541 = vpop.xlane.xlu0 %540
        %v542 = vmax.f32 %v533, %v534
        %543 = vmax.xlane.f32.xlu0 %v542
        %v544 = vpop.xlane.xlu0 %543
        %v545 = vmax.f32 %v535, %v536
        %546 = vmax.xlane.f32.xlu0 %v545
        %v547 = vpop.xlane.xlu0 %546
        %v548 = vmax.f32 %v537, %v538
        %549 = vmax.xlane.f32.xlu0 %v548
        %v550 = vpop.xlane.xlu0 %549
        %vm551 = vcmask 7168
        %552 = vst.msk [vmem:[%s259] sm:$0xff] %vm551, %v541
        %553 = vst.msk [vmem:[%s259 + $0x8] sm:$0xff] %vm551, %v544
        %554 = vst.msk [vmem:[%s259 + $0x10] sm:$0xff] %vm551, %v547
        %555 = vst.msk [vmem:[%s259 + $0x18] sm:$0xff] %vm551, %v550
      $region44: #{tpu_custom_call.1} parent=31 // pred_fallthru
        _
      %p556 = scmp.lt.s32.totalorder %s19, 1
      %s557 = scalar_select %p556, %s19, 1
      %p558 = scmp.lt.s32.totalorder %s20, 0
      %s559 = scalar_select %p558, %s20, 0
      %s560 = smul.addr %s559, 4
      %s561 = smul.addr %s557, 4
      %s562 = sadd.s32 %s560, %s561
      %s563 = smul.addr %s562, 8
      %s564 = scalar_lea.vmem %s3, %s563
      // Predicated region
      $region45: #{tpu_custom_call.1} parent=31 // pred_check
        %p565 = pneg %p135
      $region46: #{tpu_custom_call.1} parent=31 // pred_check_branch
        %567 = sbr.rel (%p565) target = $region48
      $region47: #{tpu_custom_call.1} parent=31 // pred_region
        _
      $region48: #{tpu_custom_call.1} parent=31 // pred_fallthru
        _
    $region32: #{tpu_custom_call.1} parent=5 // pred_fallthru
      _
    %p568 = scmp.le.s32.totalorder 2, %s9
    // Predicated region
    $region49: #{tpu_custom_call.1} parent=5 // pred_check
      %p569 = pneg %p568
    $region50: #{tpu_custom_call.1} parent=5 // pred_check_branch
      %571 = sbr.rel (%p569) target = $region52
    $region51: #{tpu_custom_call.1} parent=5 // pred_region
      %s572 = ssub.s32 %s9, 2
      // Predicated region
      $region53: #{tpu_custom_call.1} parent=51 // pred_check
        %p573 = pneg %p141
      $region54: #{tpu_custom_call.1} parent=51 // pred_check_branch
        %575 = sbr.rel (%p573) target = $region56
      $region55: #{tpu_custom_call.1} parent=51 // pred_region
        %p576 = scmp.lt.s32.totalorder %s22, 1
        %s577 = scalar_select %p576, %s22, 1
        %p578 = scmp.lt.s32.totalorder %s23, 0
        %s579 = scalar_select %p578, %s23, 0
        %s580 = smul.addr %s579, 4
        %s581 = smul.addr %s577, 4
        %s582 = sadd.s32 %s580, %s581
        %s583 = smul.addr %s582, 8
        %s584 = scalar_lea.vmem %s3, %s583
      $region56: #{tpu_custom_call.1} parent=51 // pred_fallthru
        _
    $region52: #{tpu_custom_call.1} parent=5 // pred_fallthru
      _
  $region6: #{tpu_custom_call.1} parent=0 // loop_footer
    %s13 = sadd.s32 1, %s9
  $region7: #{tpu_custom_call.1} parent=0 // loop_footer_branch
    %8 = sbr.rel target = $region3
  $region8: #{tpu_custom_call.1} parent=0 // loop_exit
    _

</llo_original>
